<compile_context>
chip_gen: v7x
topology: tpu7x:2x2x1
jax: 0.10.0
libtpu: 0.0.40
codegen_flags: <defaults>
</compile_context>

<pallas_src>
from functools import partial

import jax
import jax.numpy as jnp
from jax import lax
from jax.experimental import pallas as pl
from jax.experimental.pallas import tpu as pltpu

HP = 128  # fused hidden width, padded to one full lane tile (2*hidden <= HP)


# ----------------------------- Pallas kernel --------------------------------
def _make_fused_double_q_kernel(act_dim: int, state_dim: int, hp: int):
    """Kernel closure; weight buffer has four 128-lane sections:
       [W1a^T | W1s^T | W2^T | W3^T], each (hp, hp) with zero padding."""
    c1, c2, c3, c4 = hp, 2 * hp, 3 * hp, 4 * hp
    dn_t = (((1,), (1,)), ((), ()))  # contract last dims: W @ x^T (Q@K^T form)

    def kernel(a_ref, s_ref, w_ref, b_ref, o_ref):
        # f32 inputs -> bf16 matmul operands (accumulation stays f32).
        a = a_ref[...].astype(jnp.bfloat16)          # (tb, A)
        s = s_ref[...].astype(jnp.bfloat16)          # (tb, S)

        w1a = w_ref[:, 0:act_dim]                    # (hp, A)   bf16
        w1s = w_ref[:, c1:c1 + state_dim]            # (hp, S)   bf16
        w2 = w_ref[:, c2:c3]                         # (hp, hp)  bf16
        w3 = w_ref[:, c3:c4]                         # (hp, hp)  bf16
        b1 = b_ref[:, 0:1]                           # (hp, 1)   f32 columns
        b2 = b_ref[:, 1:2]
        b3 = b_ref[:, 2:3]

        # Layer 1 (transposed): h = relu(W1a @ a^T + W1s @ s^T + b1)
        h = lax.dot_general(w1a, a, dn_t, preferred_element_type=jnp.float32)
        h = h + lax.dot_general(w1s, s, dn_t, preferred_element_type=jnp.float32)
        h = jnp.maximum(h + b1, 0.0)                 # (hp, tb) f32

        # Layer 2
        h = jnp.dot(w2, h.astype(jnp.bfloat16), preferred_element_type=jnp.float32)
        h = jnp.maximum(h + b2, 0.0)

        # Output layer: sublane row 0 = Q1, row 1 = Q2 (batch on lanes).
        q = jnp.dot(w3, h.astype(jnp.bfloat16), preferred_element_type=jnp.float32)
        q = q + b3                                   # (hp, tb) f32

        # min over the two heads -> lane-dense (1, tb) row.
        o_ref[...] = jnp.minimum(q[0:1, :], q[1:2, :]).astype(o_ref.dtype)

    return kernel


# ------------------------------ tiling helper --------------------------------
def _round_up(x: int, m: int) -> int:
    return ((x + m - 1) // m) * m


def _choose_tile(batch: int, tile_b: int):
    """Pick (tile_b, padded_batch). Single block for small batches; otherwise
    multiples of 256 with at least 2 grid steps (v7x megacore occupancy)."""
    if batch <= 256:
        return batch, batch
    tb = min(tile_b, _round_up(pl.cdiv(batch, 2), 256))
    b_pad = pl.cdiv(batch, tb) * tb
    return tb, b_pad


# ------------------------------ JAX wrapper ----------------------------------
@partial(jax.jit, static_argnames=("tile_b",))
def gmpg_critic_forward(action, state, w_packed, b_packed, *, tile_b=1024):
    """GMPGCritic.forward: min(Q1([a, s]), Q2([a, s])), shape (B, 1)."""
    B, A = action.shape
    S = state.shape[1]
    hp = w_packed.shape[0]

    tb, b_pad = _choose_tile(B, tile_b)
    if b_pad > B:  # only for ragged batches; normally a no-op
        action = jnp.pad(action, ((0, b_pad - B), (0, 0)))
        state = jnp.pad(state, ((0, b_pad - B), (0, 0)))
    grid = (b_pad // tb,)

    kernel = _make_fused_double_q_kernel(A, S, hp)

    flops = 2 * b_pad * hp * (A + S + 2 * hp)
    bytes_accessed = (b_pad * (A + S) * 4        # f32 activations in
                      + w_packed.size * 2        # bf16 resident weights
                      + b_packed.size * 4        # f32 resident biases
                      + b_pad * 4)               # f32 lane-dense output row

    out = pl.pallas_call(
        kernel,
        grid=grid,
        in_specs=[
            pl.BlockSpec((tb, A), lambda i: (i, 0)),              # action tile
            pl.BlockSpec((tb, S), lambda i: (i, 0)),              # state tile
            pl.BlockSpec(w_packed.shape, lambda i: (0, 0)),       # resident W
            pl.BlockSpec(b_packed.shape, lambda i: (0, 0)),       # resident b
        ],
        out_specs=pl.BlockSpec((1, tb), lambda i: (0, i)),        # lane-dense
        out_shape=jax.ShapeDtypeStruct((1, b_pad), jnp.float32),
        compiler_params=pltpu.CompilerParams(
            dimension_semantics=("parallel",),
            vmem_limit_bytes=64 * 1024 * 1024,
        ),
        cost_estimate=pl.CostEstimate(
            flops=flops, transcendentals=0, bytes_accessed=bytes_accessed),
    )(action, state, w_packed, b_packed)

    return out[0, :B][:, None]


# --------------------- parameter init & fused packing ------------------------
def init_head_params(key, in_dim, hidden):
    """One Q head: in_dim -> hidden -> hidden -> 1 (PyTorch-Linear-like init)."""
    ks = jax.random.split(key, 6)

    def lin(kw, kb, fi, fo):
        s = 1.0 / jnp.sqrt(jnp.float32(fi))
        w = jax.random.uniform(kw, (fi, fo), jnp.float32, -s, s)
        b = jax.random.uniform(kb, (fo,), jnp.float32, -s, s)
        return w, b

    w1, b1 = lin(ks[0], ks[1], in_dim, hidden)
    w2, b2 = lin(ks[2], ks[3], hidden, hidden)
    w3, b3 = lin(ks[4], ks[5], hidden, 1)
    return (w1, b1, w2, b2, w3, b3)


def pack_params(head1, head2, act_dim, state_dim, hidden, hp=HP):
    """Pack both Q heads (transposed + block-diagonal) into:
         w_packed bf16 (hp, 4*hp): lane sections [W1a^T | W1s^T | W2^T | W3^T]
         b_packed f32  (hp, 8):    columns [b1 | b2 | b3 | zeros]
       Head 1 uses hidden rows [0, H), head 2 rows [H, 2H); no cross-talk."""
    H = hidden
    assert 2 * H <= hp and act_dim <= hp and state_dim <= hp
    w1_1, b1_1, w2_1, b2_1, w3_1, b3_1 = head1
    w1_2, b1_2, w2_2, b2_2, w3_2, b3_2 = head2

    w = jnp.zeros((hp, 4 * hp), jnp.float32)
    # layer 1, action features (transposed)
    w = w.at[0:H, 0:act_dim].set(w1_1[:act_dim, :].T)
    w = w.at[H:2 * H, 0:act_dim].set(w1_2[:act_dim, :].T)
    # layer 1, state features (transposed)
    w = w.at[0:H, hp:hp + state_dim].set(w1_1[act_dim:, :].T)
    w = w.at[H:2 * H, hp:hp + state_dim].set(w1_2[act_dim:, :].T)
    # layer 2, block diagonal (transposed)
    w = w.at[0:H, 2 * hp:2 * hp + H].set(w2_1.T)
    w = w.at[H:2 * H, 2 * hp + H:2 * hp + 2 * H].set(w2_2.T)
    # output layer: Q1 -> sublane row 0, Q2 -> sublane row 1
    w = w.at[0, 3 * hp:3 * hp + H].set(w3_1[:, 0])
    w = w.at[1, 3 * hp + H:3 * hp + 2 * H].set(w3_2[:, 0])

    b = jnp.zeros((hp, 8), jnp.float32)
    b = b.at[0:H, 0].set(b1_1).at[H:2 * H, 0].set(b1_2)
    b = b.at[0:H, 1].set(b2_1).at[H:2 * H, 1].set(b2_2)
    b = b.at[0, 2].set(b3_1[0]).at[1, 2].set(b3_2[0])

    return w.astype(jnp.bfloat16), b


# --------------------------------- main ---------------------------------------
if __name__ == "__main__":
    B, ACT_DIM, STATE_DIM, HIDDEN = 8, 8, 16, 32
    IN_DIM = ACT_DIM + STATE_DIM

    root = jax.random.PRNGKey(0)
    k_a, k_s, k_p1, k_p2 = jax.random.split(root, 4)

    action = jax.random.normal(k_a, (B, ACT_DIM), jnp.float32)
    state = jax.random.normal(k_s, (B, STATE_DIM), jnp.float32)

    head1 = init_head_params(k_p1, IN_DIM, HIDDEN)
    head2 = init_head_params(k_p2, IN_DIM, HIDDEN)
    w_packed, b_packed = pack_params(head1, head2, ACT_DIM, STATE_DIM, HIDDEN)

    q = gmpg_critic_forward(action, state, w_packed, b_packed)
    q = jax.block_until_ready(q)

    # Reference 1: emulates the kernel math (bf16 matmul operands, f32 accum).
    def head_ref(x, p, cast):
        w1, b1, w2, b2, w3, b3 = p
        c = (lambda t: t.astype(jnp.bfloat16)) if cast else (lambda t: t)
        h = jnp.maximum(
            jnp.dot(c(x), c(w1), preferred_element_type=jnp.float32) + b1, 0.0)
        h = jnp.maximum(
            jnp.dot(c(h), c(w2), preferred_element_type=jnp.float32) + b2, 0.0)
        return jnp.dot(c(h), c(w3), preferred_element_type=jnp.float32) + b3

    x_ref = jnp.concatenate([action, state], axis=-1)
    exp_bf16 = jnp.minimum(head_ref(x_ref, head1, True), head_ref(x_ref, head2, True))
    exp_f32 = jnp.minimum(head_ref(x_ref, head1, False), head_ref(x_ref, head2, False))

    assert q.shape == (B, 1)
    assert jnp.allclose(q, exp_bf16, atol=2e-3, rtol=2e-3)   # matches kernel math
    assert jnp.allclose(q, exp_f32, atol=5e-2, rtol=5e-2)    # close to full f32

    # TODO(synk): q_target / VNetwork / loss helpers of GMPGCritic are training
    # utilities, not part of forward(); not implemented here.
    print("KERNEL_OK")
</pallas_src>

<mosaic_0001>
module attributes {stable_mosaic.version = 11 : i64} {
  func.func @kernel(%arg0: i32, %arg1: memref<8x8xf32, #tpu.memory_space<vmem>>, %arg2: memref<8x16xf32, #tpu.memory_space<vmem>>, %arg3: memref<128x512xbf16, #tpu.memory_space<vmem>>, %arg4: memref<128x8xf32, #tpu.memory_space<vmem>>, %arg5: memref<1x8xf32, #tpu.memory_space<vmem>>) attributes {dimension_semantics = [#tpu.dimension_semantics<parallel>], iteration_bounds = array<i64: 1>, scalar_prefetch = 0 : i64, scratch_operands = 0 : i64, tpu.core_type = #tpu.core_type<tc>, window_params = [{transform_indices = @transform_0, window_bounds = array<i64: 8, 8>}, {transform_indices = @transform_1, window_bounds = array<i64: 8, 16>}, {pipeline_mode = #tpu.pipeline_mode<synchronous>, transform_indices = @transform_2, window_bounds = array<i64: 128, 512>}, {pipeline_mode = #tpu.pipeline_mode<synchronous>, transform_indices = @transform_3, window_bounds = array<i64: 128, 8>}, {transform_indices = @transform_4, window_bounds = array<i64: 1, 8>}]} {
    %c0 = arith.constant 0 : index
    %c0_0 = arith.constant 0 : index
    %0 = vector.load %arg1[%c0, %c0_0] : memref<8x8xf32, #tpu.memory_space<vmem>>, vector<8x8xf32>
    %1 = arith.truncf %0 : vector<8x8xf32> to vector<8x8xbf16>
    %c0_1 = arith.constant 0 : index
    %c0_2 = arith.constant 0 : index
    %2 = vector.load %arg2[%c0_1, %c0_2] : memref<8x16xf32, #tpu.memory_space<vmem>>, vector<8x16xf32>
    %3 = arith.truncf %2 : vector<8x16xf32> to vector<8x16xbf16>
    %c0_3 = arith.constant 0 : index
    %c0_4 = arith.constant 0 : index
    %4 = vector.load %arg3[%c0_3, %c0_4] : memref<128x512xbf16, #tpu.memory_space<vmem>>, vector<128x8xbf16>
    %c0_5 = arith.constant 0 : index
    %c128 = arith.constant 128 : index
    %5 = vector.load %arg3[%c0_5, %c128] : memref<128x512xbf16, #tpu.memory_space<vmem>>, vector<128x16xbf16>
    %c0_6 = arith.constant 0 : index
    %c256 = arith.constant 256 : index
    %6 = vector.load %arg3[%c0_6, %c256] : memref<128x512xbf16, #tpu.memory_space<vmem>>, vector<128x128xbf16>
    %c0_7 = arith.constant 0 : index
    %c384 = arith.constant 384 : index
    %7 = vector.load %arg3[%c0_7, %c384] : memref<128x512xbf16, #tpu.memory_space<vmem>>, vector<128x128xbf16>
    %c0_8 = arith.constant 0 : index
    %c0_9 = arith.constant 0 : index
    %8 = vector.load %arg4[%c0_8, %c0_9] : memref<128x8xf32, #tpu.memory_space<vmem>>, vector<128x1xf32>
    %c0_10 = arith.constant 0 : index
    %c1 = arith.constant 1 : index
    %9 = vector.load %arg4[%c0_10, %c1] : memref<128x8xf32, #tpu.memory_space<vmem>>, vector<128x1xf32>
    %c0_11 = arith.constant 0 : index
    %c2 = arith.constant 2 : index
    %10 = vector.load %arg4[%c0_11, %c2] : memref<128x8xf32, #tpu.memory_space<vmem>>, vector<128x1xf32>
    %cst = arith.constant dense<0.000000e+00> : vector<128x8xf32>
    %11 = tpu.matmul %4, %1, %cst {dimension_numbers = #tpu.dot_dimension_numbers<[1], [1], [0], [0], [0, 0, 1, 0], [], []>} : vector<128x8xbf16>, vector<8x8xbf16>, vector<128x8xf32> -> vector<128x8xf32>
    %cst_12 = arith.constant dense<0.000000e+00> : vector<128x8xf32>
    %12 = tpu.matmul %5, %3, %cst_12 {dimension_numbers = #tpu.dot_dimension_numbers<[1], [1], [0], [0], [0, 0, 1, 0], [], []>} : vector<128x16xbf16>, vector<8x16xbf16>, vector<128x8xf32> -> vector<128x8xf32>
    %13 = arith.addf %11, %12 : vector<128x8xf32>
    %14 = vector.broadcast %8 : vector<128x1xf32> to vector<128x8xf32>
    %15 = arith.addf %13, %14 : vector<128x8xf32>
    %cst_13 = arith.constant 0.000000e+00 : f32
    %16 = vector.broadcast %cst_13 : f32 to vector<128x8xf32>
    %17 = arith.maximumf %15, %16 : vector<128x8xf32>
    %18 = arith.truncf %17 : vector<128x8xf32> to vector<128x8xbf16>
    %cst_14 = arith.constant dense<0.000000e+00> : vector<128x8xf32>
    %19 = tpu.matmul %6, %18, %cst_14 {dimension_numbers = #tpu.dot_dimension_numbers<[1], [0], [0], [1], [0, 0, 1, 1], [], []>} : vector<128x128xbf16>, vector<128x8xbf16>, vector<128x8xf32> -> vector<128x8xf32>
    %20 = vector.broadcast %9 : vector<128x1xf32> to vector<128x8xf32>
    %21 = arith.addf %19, %20 : vector<128x8xf32>
    %cst_15 = arith.constant 0.000000e+00 : f32
    %22 = vector.broadcast %cst_15 : f32 to vector<128x8xf32>
    %23 = arith.maximumf %21, %22 : vector<128x8xf32>
    %24 = arith.truncf %23 : vector<128x8xf32> to vector<128x8xbf16>
    %cst_16 = arith.constant dense<0.000000e+00> : vector<128x8xf32>
    %25 = tpu.matmul %7, %24, %cst_16 {dimension_numbers = #tpu.dot_dimension_numbers<[1], [0], [0], [1], [0, 0, 1, 1], [], []>} : vector<128x128xbf16>, vector<128x8xbf16>, vector<128x8xf32> -> vector<128x8xf32>
    %26 = vector.broadcast %10 : vector<128x1xf32> to vector<128x8xf32>
    %27 = arith.addf %25, %26 : vector<128x8xf32>
    %28 = vector.extract_strided_slice %27 {offsets = [0, 0], sizes = [1, 8], strides = [1, 1]} : vector<128x8xf32> to vector<1x8xf32>
    %29 = vector.extract_strided_slice %27 {offsets = [1, 0], sizes = [1, 8], strides = [1, 1]} : vector<128x8xf32> to vector<1x8xf32>
    %30 = arith.minimumf %28, %29 : vector<1x8xf32>
    %c0_17 = arith.constant 0 : index
    %c0_18 = arith.constant 0 : index
    %31 = vector.load %arg5[%c0_17, %c0_18] : memref<1x8xf32, #tpu.memory_space<vmem>>, vector<1x8xf32>
    tpu.vector_store %arg5[%c0_17, %c0_18], %30 {strides = array<i32>} : memref<1x8xf32, #tpu.memory_space<vmem>>, vector<1x8xf32>,
    return
  }
  func.func @transform_0(%arg0: i32) -> (i32, i32) {
    %c0_i32 = arith.constant 0 : i32
    %c0_i32_0 = arith.constant 0 : i32
    return %arg0, %c0_i32 : i32, i32
  }
  func.func @transform_1(%arg0: i32) -> (i32, i32) {
    %c0_i32 = arith.constant 0 : i32
    %c0_i32_0 = arith.constant 0 : i32
    return %arg0, %c0_i32 : i32, i32
  }
  func.func @transform_2(%arg0: i32) -> (i32, i32) {
    %c0_i32 = arith.constant 0 : i32
    %c0_i32_0 = arith.constant 0 : i32
    %c0_i32_1 = arith.constant 0 : i32
    return %c0_i32, %c0_i32_0 : i32, i32
  }
  func.func @transform_3(%arg0: i32) -> (i32, i32) {
    %c0_i32 = arith.constant 0 : i32
    %c0_i32_0 = arith.constant 0 : i32
    %c0_i32_1 = arith.constant 0 : i32
    return %c0_i32, %c0_i32_0 : i32, i32
  }
  func.func @transform_4(%arg0: i32) -> (i32, i32) {
    %c0_i32 = arith.constant 0 : i32
    %c0_i32_0 = arith.constant 0 : i32
    return %c0_i32, %arg0 : i32, i32
  }
}

</mosaic_0001>

<llo_original>
// kernel: gmpg_critic_forward.1
$region0: #{gmpg_critic_forward.1}
  #allocation0 [shape = 'u32[]', space=smem, size = 0x4, offset = 0x4, fixed_abs, tag = 'smem constant byte address 0x4 - core index']
  #allocation1 [shape = 'u32[144,128]{1,0:T(1,128)}', space=vmem, size = 0x12000, scoped, tag = 'internal scratch']
  %s0 = inlined_call_operand.hbm [shape: f32[8,8], index: 0, kind: input, shape index: {}]
  %s1 = inlined_call_operand.hbm [shape: f32[8,16], index: 1, kind: input, shape index: {}]
  %s2 = inlined_call_operand.hbm [shape: bf16[128,512], index: 2, kind: input, shape index: {}]
  %s3 = inlined_call_operand.hbm [shape: f32[128,8], index: 3, kind: input, shape index: {}]
  %s4 = inlined_call_operand.hbm [shape: f32[1,8], index: 4, kind: output, shape index: {}]
  %s5 = sld [smem:[#allocation0]]
  $region42: #{gmpg_critic_forward.1} parent=0
    _
  %s7 = ssub.s32 1, %s5
  %s8 = scalar_select 0, %s7, %s5
  $region1: #{gmpg_critic_forward.1} parent=0
    #allocation2 [shape = 'u8[4096]{0}', space=vmem, size = 0x1000, scoped, tag = 'input window, operand 0, single buffered']
    #allocation3 [shape = 's32[1]{0}', space=sflag, size = 0x4, scoped, tag = 'scoped memory for gmpg_critic_forward.1']
    #allocation4 [shape = 's32[1]{0}', space=sflag, size = 0x4, scoped, tag = 'scoped memory for gmpg_critic_forward.1']
    #allocation5 [shape = 'u8[4096]{0}', space=vmem, size = 0x1000, scoped, tag = 'input window, operand 1, single buffered']
    #allocation6 [shape = 's32[1]{0}', space=sflag, size = 0x4, scoped, tag = 'scoped memory for gmpg_critic_forward.1']
    #allocation7 [shape = 'u8[131072]{0}', space=vmem, size = 0x20000, scoped, tag = 'input window, operand 2, single buffered']
    #allocation8 [shape = 'u8[65536]{0}', space=vmem, size = 0x10000, scoped, tag = 'input window, operand 3, single buffered']
    #allocation9 [shape = 's32[1]{0}', space=sflag, size = 0x4, scoped, tag = 'scoped memory for gmpg_critic_forward.1']
    #allocation10 [shape = 'u8[512]{0}', space=vmem, size = 0x400, scoped, tag = 'output window, operand 0, single buffered']
    %9 = vsyncpa [#allocation3], 0
    %10 = vsyncpa [#allocation6], 0
    %11 = vsyncpa [#allocation9], 0
    %12 = vsyncpa [#allocation4], 0
    // Predicated region
    $region2: #{gmpg_critic_forward.1} parent=1 // pred_check
      _
    $region3: #{gmpg_critic_forward.1} parent=1 // pred_check_branch
      %14 = sbr.rel (0) target = $region5
    $region4: #{gmpg_critic_forward.1} parent=1 // pred_region
      %s16 = ssub.s32 128, 128
      %17 = vsyncadd [#allocation3], %s16
      %s19 = sshll.u32 [#allocation2], 4
      %s20 = int_to_ptr.vmem [resolvable:$true] %s19
      %22 = dma.hbm_to_vmem [thread:$0]  %s0, 128, %s20, [#allocation3]
    $region5: #{gmpg_critic_forward.1} parent=1 // pred_fallthru
      _
    // Predicated region
    $region6: #{gmpg_critic_forward.1} parent=1 // pred_check
      _
    $region7: #{gmpg_critic_forward.1} parent=1 // pred_check_branch
      %24 = sbr.rel (0) target = $region9
    $region8: #{gmpg_critic_forward.1} parent=1 // pred_region
      %s26 = ssub.s32 128, 128
      %27 = vsyncadd [#allocation6], %s26
      %s29 = sshll.u32 [#allocation5], 4
      %s30 = int_to_ptr.vmem [resolvable:$true] %s29
      %32 = dma.hbm_to_vmem [thread:$0]  %s1, 128, %s30, [#allocation6]
    $region9: #{gmpg_critic_forward.1} parent=1 // pred_fallthru
      _
    // Predicated region
    $region10: #{gmpg_critic_forward.1} parent=1 // pred_check
      _
    $region11: #{gmpg_critic_forward.1} parent=1 // pred_check_branch
      %34 = sbr.rel (0) target = $region13
    $region12: #{gmpg_critic_forward.1} parent=1 // pred_region
      %s36 = ssub.s32 4096, 4096
      %37 = vsyncadd [#allocation6], %s36
      %s38 = sshll.u32 [#allocation7], 4
      %s39 = int_to_ptr.vmem [resolvable:$true] %s38
      %44 = dma.hbm_to_vmem [thread:$0]  %s2, 4096, %s39, [#allocation6], 256, 256, 16
    $region13: #{gmpg_critic_forward.1} parent=1 // pred_fallthru
      _
    // Predicated region
    $region14: #{gmpg_critic_forward.1} parent=1 // pred_check
      _
    $region15: #{gmpg_critic_forward.1} parent=1 // pred_check_branch
      %46 = sbr.rel (0) target = $region17
    $region16: #{gmpg_critic_forward.1} parent=1 // pred_region
      %s48 = ssub.s32 2048, 2048
      %49 = vsyncadd [#allocation9], %s48
      %s50 = sshll.u32 [#allocation8], 4
      %s51 = int_to_ptr.vmem [resolvable:$true] %s50
      %56 = dma.hbm_to_vmem [thread:$0]  %s3, 2048, %s51, [#allocation9], 128, 128, 8
    $region17: #{gmpg_critic_forward.1} parent=1 // pred_fallthru
      _
    // Predicated region
    $region18: #{gmpg_critic_forward.1} parent=1 // pred_check
      _
    $region19: #{gmpg_critic_forward.1} parent=1 // pred_check_branch
      %58 = sbr.rel (0) target = $region21
    $region20: #{gmpg_critic_forward.1} parent=1 // pred_region
      %59 = dma.done [#allocation3], 128
    $region21: #{gmpg_critic_forward.1} parent=1 // pred_fallthru
      _
    // Predicated region
    $region22: #{gmpg_critic_forward.1} parent=1 // pred_check
      _
    $region23: #{gmpg_critic_forward.1} parent=1 // pred_check_branch
      %61 = sbr.rel (0) target = $region25
    $region24: #{gmpg_critic_forward.1} parent=1 // pred_region
      %62 = dma.done [#allocation6], 128
    $region25: #{gmpg_critic_forward.1} parent=1 // pred_fallthru
      _
    // Predicated region
    $region26: #{gmpg_critic_forward.1} parent=1 // pred_check
      _
    $region27: #{gmpg_critic_forward.1} parent=1 // pred_check_branch
      %64 = sbr.rel (0) target = $region29
    $region28: #{gmpg_critic_forward.1} parent=1 // pred_region
      %65 = dma.done [#allocation6], 4096
    $region29: #{gmpg_critic_forward.1} parent=1 // pred_fallthru
      _
    // Predicated region
    $region30: #{gmpg_critic_forward.1} parent=1 // pred_check
      _
    $region31: #{gmpg_critic_forward.1} parent=1 // pred_check_branch
      %67 = sbr.rel (0) target = $region33
    $region32: #{gmpg_critic_forward.1} parent=1 // pred_region
      %68 = dma.done [#allocation9], 2048
    $region33: #{gmpg_critic_forward.1} parent=1 // pred_fallthru
      _
    %v70 = vld [vmem:[#allocation2] sm:$0xff]
    %v71 = vpack.c.bf16 %v70, %v70
    %v72 = vld [vmem:[#allocation5] sm:$0xff]
    %v73 = vpack.c.bf16 %v72, %v72
    %v74 = vld [vmem:[#allocation7] sm:$0xf]
    %v75 = vld [vmem:[#allocation7 + $0x10] sm:$0xf]
    %v76 = vld [vmem:[#allocation7 + $0x20] sm:$0xf]
    %v77 = vld [vmem:[#allocation7 + $0x30] sm:$0xf]
    %v78 = vld [vmem:[#allocation7 + $0x40] sm:$0xf]
    %v79 = vld [vmem:[#allocation7 + $0x50] sm:$0xf]
    %v80 = vld [vmem:[#allocation7 + $0x60] sm:$0xf]
    %v81 = vld [vmem:[#allocation7 + $0x70] sm:$0xf]
    %v82 = vld [vmem:[#allocation7 + $0x80] sm:$0xf]
    %v83 = vld [vmem:[#allocation7 + $0x90] sm:$0xf]
    %v84 = vld [vmem:[#allocation7 + $0xa0] sm:$0xf]
    %v85 = vld [vmem:[#allocation7 + $0xb0] sm:$0xf]
    %v86 = vld [vmem:[#allocation7 + $0xc0] sm:$0xf]
    %v87 = vld [vmem:[#allocation7 + $0xd0] sm:$0xf]
    %v88 = vld [vmem:[#allocation7 + $0xe0] sm:$0xf]
    %v89 = vld [vmem:[#allocation7 + $0xf0] sm:$0xf]
    %v90 = vld [vmem:[#allocation7 + $0x4] sm:$0xf]
    %v91 = vld [vmem:[#allocation7 + $0x14] sm:$0xf]
    %v92 = vld [vmem:[#allocation7 + $0x24] sm:$0xf]
    %v93 = vld [vmem:[#allocation7 + $0x34] sm:$0xf]
    %v94 = vld [vmem:[#allocation7 + $0x44] sm:$0xf]
    %v95 = vld [vmem:[#allocation7 + $0x54] sm:$0xf]
    %v96 = vld [vmem:[#allocation7 + $0x64] sm:$0xf]
    %v97 = vld [vmem:[#allocation7 + $0x74] sm:$0xf]
    %v98 = vld [vmem:[#allocation7 + $0x84] sm:$0xf]
    %v99 = vld [vmem:[#allocation7 + $0x94] sm:$0xf]
    %v100 = vld [vmem:[#allocation7 + $0xa4] sm:$0xf]
    %v101 = vld [vmem:[#allocation7 + $0xb4] sm:$0xf]
    %v102 = vld [vmem:[#allocation7 + $0xc4] sm:$0xf]
    %v103 = vld [vmem:[#allocation7 + $0xd4] sm:$0xf]
    %v104 = vld [vmem:[#allocation7 + $0xe4] sm:$0xf]
    %v105 = vld [vmem:[#allocation7 + $0xf4] sm:$0xf]
    %v106 = vld [vmem:[#allocation7 + $0x8] sm:$0xf]
    %v107 = vld [vmem:[#allocation7 + $0x18] sm:$0xf]
    %v108 = vld [vmem:[#allocation7 + $0x28] sm:$0xf]
    %v109 = vld [vmem:[#allocation7 + $0x38] sm:$0xf]
    %v110 = vld [vmem:[#allocation7 + $0x48] sm:$0xf]
    %v111 = vld [vmem:[#allocation7 + $0x58] sm:$0xf]
    %v112 = vld [vmem:[#allocation7 + $0x68] sm:$0xf]
    %v113 = vld [vmem:[#allocation7 + $0x78] sm:$0xf]
    %v114 = vld [vmem:[#allocation7 + $0x88] sm:$0xf]
    %v115 = vld [vmem:[#allocation7 + $0x98] sm:$0xf]
    %v116 = vld [vmem:[#allocation7 + $0xa8] sm:$0xf]
    %v117 = vld [vmem:[#allocation7 + $0xb8] sm:$0xf]
    %v118 = vld [vmem:[#allocation7 + $0xc8] sm:$0xf]
    %v119 = vld [vmem:[#allocation7 + $0xd8] sm:$0xf]
    %v120 = vld [vmem:[#allocation7 + $0xe8] sm:$0xf]
    %v121 = vld [vmem:[#allocation7 + $0xf8] sm:$0xf]
    %v122 = vld [vmem:[#allocation7 + $0xc] sm:$0xf]
    %v123 = vld [vmem:[#allocation7 + $0x1c] sm:$0xf]
    %v124 = vld [vmem:[#allocation7 + $0x2c] sm:$0xf]
    %v125 = vld [vmem:[#allocation7 + $0x3c] sm:$0xf]
    %v126 = vld [vmem:[#allocation7 + $0x4c] sm:$0xf]
    %v127 = vld [vmem:[#allocation7 + $0x5c] sm:$0xf]
    %v128 = vld [vmem:[#allocation7 + $0x6c] sm:$0xf]
    %v129 = vld [vmem:[#allocation7 + $0x7c] sm:$0xf]
    %v130 = vld [vmem:[#allocation7 + $0x8c] sm:$0xf]
    %v131 = vld [vmem:[#allocation7 + $0x9c] sm:$0xf]
    %v132 = vld [vmem:[#allocation7 + $0xac] sm:$0xf]
    %v133 = vld [vmem:[#allocation7 + $0xbc] sm:$0xf]
    %v134 = vld [vmem:[#allocation7 + $0xcc] sm:$0xf]
    %v135 = vld [vmem:[#allocation7 + $0xdc] sm:$0xf]
    %v136 = vld [vmem:[#allocation7 + $0xec] sm:$0xf]
    %v137 = vld [vmem:[#allocation7 + $0xfc] sm:$0xf]
    %v138 = vld [vmem:[#allocation8] sm:$0xff]
    %v139 = vld [vmem:[#allocation8 + $0x8] sm:$0xff]
    %v140 = vld [vmem:[#allocation8 + $0x10] sm:$0xff]
    %v141 = vld [vmem:[#allocation8 + $0x18] sm:$0xff]
    %v142 = vld [vmem:[#allocation8 + $0x20] sm:$0xff]
    %v143 = vld [vmem:[#allocation8 + $0x28] sm:$0xff]
    %v144 = vld [vmem:[#allocation8 + $0x30] sm:$0xff]
    %v145 = vld [vmem:[#allocation8 + $0x38] sm:$0xff]
    %v146 = vld [vmem:[#allocation8 + $0x40] sm:$0xff]
    %v147 = vld [vmem:[#allocation8 + $0x48] sm:$0xff]
    %v148 = vld [vmem:[#allocation8 + $0x50] sm:$0xff]
    %v149 = vld [vmem:[#allocation8 + $0x58] sm:$0xff]
    %v150 = vld [vmem:[#allocation8 + $0x60] sm:$0xff]
    %v151 = vld [vmem:[#allocation8 + $0x68] sm:$0xff]
    %v152 = vld [vmem:[#allocation8 + $0x70] sm:$0xff]
    %v153 = vld [vmem:[#allocation8 + $0x78] sm:$0xff]
    %v170 = vunpack.c.l.b16 %v90
    %v171 = vunpack.c.l.b16 %v91
    %v172 = vunpack.c.l.b16 %v92
    %v173 = vunpack.c.l.b16 %v93
    %v174 = vunpack.c.l.b16 %v94
    %v175 = vunpack.c.l.b16 %v95
    %v176 = vunpack.c.l.b16 %v96
    %v177 = vunpack.c.l.b16 %v97
    %v178 = vunpack.c.l.b16 %v98
    %v179 = vunpack.c.l.b16 %v99
    %v180 = vunpack.c.l.b16 %v100
    %v181 = vunpack.c.l.b16 %v101
    %v182 = vunpack.c.l.b16 %v102
    %v183 = vunpack.c.l.b16 %v103
    %v184 = vunpack.c.l.b16 %v104
    %v185 = vunpack.c.l.b16 %v105
    %v186 = vpack.c.b16 %v171, %v170
    %v187 = vpack.c.b16 %v173, %v172
    %v188 = vpack.c.b16 %v175, %v174
    %v189 = vpack.c.b16 %v177, %v176
    %v190 = vpack.c.b16 %v179, %v178
    %v191 = vpack.c.b16 %v181, %v180
    %v192 = vpack.c.b16 %v183, %v182
    %v193 = vpack.c.b16 %v185, %v184
    %vm194 = vcmask 130048
    %v196 = vsel %vm194, %v186, 0
    %v199 = vsel %vm194, %v187, 0
    %v202 = vsel %vm194, %v188, 0
    %v205 = vsel %vm194, %v189, 0
    %v208 = vsel %vm194, %v190, 0
    %v211 = vsel %vm194, %v191, 0
    %v214 = vsel %vm194, %v192, 0
    %v217 = vsel %vm194, %v193, 0
    %v220 = vsel %vm194, %v73, 0
    %222 = vmatprep.subr.bf16.mxu0 0
    %223 = vmatpush1.bf16.xpose.msra.mxu0 %v220
    %224 = vmatprep.subr.bf16.mxu0 0
    %225 = vmatpush1.bf16.xpose.msra.mxu0 0
    %226 = vmatprep.subr.bf16.mxu0 0
    %227 = vmatpush1.bf16.xpose.msra.mxu0 0
    %228 = vmatprep.subr.bf16.mxu0 0
    %229 = vmatpush1.bf16.xpose.msra.mxu0 0
    %230 = vmatprep.subr.bf16.mxu0 0
    %231 = vmatpush1.bf16.xpose.msra.mxu0 0
    %232 = vmatprep.subr.bf16.mxu0 0
    %233 = vmatpush1.bf16.xpose.msra.mxu0 0
    %234 = vmatprep.subr.bf16.mxu0 0
    %235 = vmatpush1.bf16.xpose.msra.mxu0 0
    %236 = vmatprep.subr.bf16.mxu0 0
    %237 = vmatpush1.bf16.xpose.msra.mxu0 0
    %238 = vmatprep.subr.bf16.mxu0 0
    %239 = vmatpush1.bf16.xpose.msra.mxu0 0
    %240 = vmatprep.subr.bf16.mxu0 0
    %241 = vmatpush1.bf16.xpose.msra.mxu0 0
    %242 = vmatprep.subr.bf16.mxu0 0
    %243 = vmatpush1.bf16.xpose.msra.mxu0 0
    %244 = vmatprep.subr.bf16.mxu0 0
    %245 = vmatpush1.bf16.xpose.msra.mxu0 0
    %246 = vmatprep.subr.bf16.mxu0 0
    %247 = vmatpush1.bf16.xpose.msra.mxu0 0
    %248 = vmatprep.subr.bf16.mxu0 0
    %249 = vmatpush1.bf16.xpose.msra.mxu0 0
    %250 = vmatprep.subr.bf16.mxu0 0
    %251 = vmatpush1.bf16.xpose.msra.mxu0 0
    %252 = vmatprep.subr.bf16.mxu0 0
    %253 = vmatpush1.bf16.xpose.msra.mxu0 0
    %254 = vmatprep.mubr.bf16.mxu0 0
    %255 = vmatmul.mubr.bf16.gmra.mrb[0].mxu0 %v196
    %v256 = vpop.f32.mrb[0].mxu0
    %v257 = vadd.f32 0.0, %v256
    %v258 = vpop.f32.mrb[0].mxu0
    %v259 = vpop.f32.mrb[0].mxu0
    %v260 = vadd.f32 0.0, %v259
    %v261 = vpop.f32.mrb[0].mxu0
    %262 = vmatprep.mubr.bf16.mxu0 0
    %263 = vmatmul.mubr.bf16.gmra.mrb[0].mxu0 %v199
    %v264 = vpop.f32.mrb[0].mxu0
    %v265 = vadd.f32 0.0, %v264
    %v266 = vpop.f32.mrb[0].mxu0
    %v267 = vpop.f32.mrb[0].mxu0
    %v268 = vadd.f32 0.0, %v267
    %v269 = vpop.f32.mrb[0].mxu0
    %270 = vmatprep.mubr.bf16.mxu0 0
    %271 = vmatmul.mubr.bf16.gmra.mrb[0].mxu0 %v202
    %v272 = vpop.f32.mrb[0].mxu0
    %v273 = vadd.f32 0.0, %v272
    %v274 = vpop.f32.mrb[0].mxu0
    %v275 = vpop.f32.mrb[0].mxu0
    %v276 = vadd.f32 0.0, %v275
    %v277 = vpop.f32.mrb[0].mxu0
    %278 = vmatprep.mubr.bf16.mxu0 0
    %279 = vmatmul.mubr.bf16.gmra.mrb[0].mxu0 %v205
    %v280 = vpop.f32.mrb[0].mxu0
    %v281 = vadd.f32 0.0, %v280
    %v282 = vpop.f32.mrb[0].mxu0
    %v283 = vpop.f32.mrb[0].mxu0
    %v284 = vadd.f32 0.0, %v283
    %v285 = vpop.f32.mrb[0].mxu0
    %286 = vmatprep.mubr.bf16.mxu0 0
    %287 = vmatmul.mubr.bf16.gmra.mrb[0].mxu0 %v208
    %v288 = vpop.f32.mrb[0].mxu0
    %v289 = vadd.f32 0.0, %v288
    %v290 = vpop.f32.mrb[0].mxu0
    %v291 = vpop.f32.mrb[0].mxu0
    %v292 = vadd.f32 0.0, %v291
    %v293 = vpop.f32.mrb[0].mxu0
    %294 = vmatprep.mubr.bf16.mxu0 0
    %295 = vmatmul.mubr.bf16.gmra.mrb[0].mxu0 %v211
    %v296 = vpop.f32.mrb[0].mxu0
    %v297 = vadd.f32 0.0, %v296
    %v298 = vpop.f32.mrb[0].mxu0
    %v299 = vpop.f32.mrb[0].mxu0
    %v300 = vadd.f32 0.0, %v299
    %v301 = vpop.f32.mrb[0].mxu0
    %302 = vmatprep.mubr.bf16.mxu0 0
    %303 = vmatmul.mubr.bf16.gmra.mrb[0].mxu0 %v214
    %v304 = vpop.f32.mrb[0].mxu0
    %v305 = vadd.f32 0.0, %v304
    %v306 = vpop.f32.mrb[0].mxu0
    %v307 = vpop.f32.mrb[0].mxu0
    %v308 = vadd.f32 0.0, %v307
    %v309 = vpop.f32.mrb[0].mxu0
    %310 = vmatprep.mubr.bf16.mxu0 0
    %311 = vmatmul.mubr.bf16.gmra.mrb[0].mxu0 %v217
    %v312 = vpop.f32.mrb[0].mxu0
    %v313 = vadd.f32 0.0, %v312
    %v314 = vpop.f32.mrb[0].mxu0
    %v315 = vpop.f32.mrb[0].mxu0
    %v316 = vadd.f32 0.0, %v315
    %v317 = vpop.f32.mrb[0].mxu0
    %318 = vdwg.mxu0
    %v335 = vunpack.c.l.b16 %v74
    %v336 = vunpack.c.l.b16 %v75
    %v337 = vunpack.c.l.b16 %v76
    %v338 = vunpack.c.l.b16 %v77
    %v339 = vunpack.c.l.b16 %v78
    %v340 = vunpack.c.l.b16 %v79
    %v341 = vunpack.c.l.b16 %v80
    %v342 = vunpack.c.l.b16 %v81
    %v343 = vunpack.c.l.b16 %v82
    %v344 = vunpack.c.l.b16 %v83
    %v345 = vunpack.c.l.b16 %v84
    %v346 = vunpack.c.l.b16 %v85
    %v347 = vunpack.c.l.b16 %v86
    %v348 = vunpack.c.l.b16 %v87
    %v349 = vunpack.c.l.b16 %v88
    %v350 = vunpack.c.l.b16 %v89
    %v351 = vpack.c.b16 %v336, %v335
    %v352 = vpack.c.b16 %v338, %v337
    %v353 = vpack.c.b16 %v340, %v339
    %v354 = vpack.c.b16 %v342, %v341
    %v355 = vpack.c.b16 %v344, %v343
    %v356 = vpack.c.b16 %v346, %v345
    %v357 = vpack.c.b16 %v348, %v347
    %v358 = vpack.c.b16 %v350, %v349
    %vm359 = vcmask 64512
    %v361 = vsel %vm359, %v351, 0
    %v364 = vsel %vm359, %v352, 0
    %v367 = vsel %vm359, %v353, 0
    %v370 = vsel %vm359, %v354, 0
    %v373 = vsel %vm359, %v355, 0
    %v376 = vsel %vm359, %v356, 0
    %v379 = vsel %vm359, %v357, 0
    %v382 = vsel %vm359, %v358, 0
    %v385 = vsel %vm359, %v71, 0
    %387 = vmatprep.subr.bf16.mxu0 0
    %388 = vmatpush1.bf16.xpose.msra.mxu0 %v385
    %389 = vmatprep.subr.bf16.mxu0 0
    %390 = vmatpush1.bf16.xpose.msra.mxu0 0
    %391 = vmatprep.subr.bf16.mxu0 0
    %392 = vmatpush1.bf16.xpose.msra.mxu0 0
    %393 = vmatprep.subr.bf16.mxu0 0
    %394 = vmatpush1.bf16.xpose.msra.mxu0 0
    %395 = vmatprep.subr.bf16.mxu0 0
    %396 = vmatpush1.bf16.xpose.msra.mxu0 0
    %397 = vmatprep.subr.bf16.mxu0 0
    %398 = vmatpush1.bf16.xpose.msra.mxu0 0
    %399 = vmatprep.subr.bf16.mxu0 0
    %400 = vmatpush1.bf16.xpose.msra.mxu0 0
    %401 = vmatprep.subr.bf16.mxu0 0
    %402 = vmatpush1.bf16.xpose.msra.mxu0 0
    %403 = vmatprep.subr.bf16.mxu0 0
    %404 = vmatpush1.bf16.xpose.msra.mxu0 0
    %405 = vmatprep.subr.bf16.mxu0 0
    %406 = vmatpush1.bf16.xpose.msra.mxu0 0
    %407 = vmatprep.subr.bf16.mxu0 0
    %408 = vmatpush1.bf16.xpose.msra.mxu0 0
    %409 = vmatprep.subr.bf16.mxu0 0
    %410 = vmatpush1.bf16.xpose.msra.mxu0 0
    %411 = vmatprep.subr.bf16.mxu0 0
    %412 = vmatpush1.bf16.xpose.msra.mxu0 0
    %413 = vmatprep.subr.bf16.mxu0 0
    %414 = vmatpush1.bf16.xpose.msra.mxu0 0
    %415 = vmatprep.subr.bf16.mxu0 0
    %416 = vmatpush1.bf16.xpose.msra.mxu0 0
    %417 = vmatprep.subr.bf16.mxu0 0
    %418 = vmatpush1.bf16.xpose.msra.mxu0 0
    %419 = vmatprep.mubr.bf16.mxu0 0
    %420 = vmatmul.mubr.bf16.gmra.mrb[0].mxu0 %v361
    %v421 = vpop.f32.mrb[0].mxu0
    %v422 = vadd.f32 %v257, %v421
    %v423 = vpop.f32.mrb[0].mxu0
    %v424 = vpop.f32.mrb[0].mxu0
    %v425 = vadd.f32 %v260, %v424
    %v426 = vpop.f32.mrb[0].mxu0
    %427 = vmatprep.mubr.bf16.mxu0 0
    %428 = vmatmul.mubr.bf16.gmra.mrb[0].mxu0 %v364
    %v429 = vpop.f32.mrb[0].mxu0
    %v430 = vadd.f32 %v265, %v429
    %v431 = vpop.f32.mrb[0].mxu0
    %v432 = vpop.f32.mrb[0].mxu0
    %v433 = vadd.f32 %v268, %v432
    %v434 = vpop.f32.mrb[0].mxu0
    %435 = vmatprep.mubr.bf16.mxu0 0
    %436 = vmatmul.mubr.bf16.gmra.mrb[0].mxu0 %v367
    %v437 = vpop.f32.mrb[0].mxu0
    %v438 = vadd.f32 %v273, %v437
    %v439 = vpop.f32.mrb[0].mxu0
    %v440 = vpop.f32.mrb[0].mxu0
    %v441 = vadd.f32 %v276, %v440
    %v442 = vpop.f32.mrb[0].mxu0
    %443 = vmatprep.mubr.bf16.mxu0 0
    %444 = vmatmul.mubr.bf16.gmra.mrb[0].mxu0 %v370
    %v445 = vpop.f32.mrb[0].mxu0
    %v446 = vadd.f32 %v281, %v445
    %v447 = vpop.f32.mrb[0].mxu0
    %v448 = vpop.f32.mrb[0].mxu0
    %v449 = vadd.f32 %v284, %v448
    %v450 = vpop.f32.mrb[0].mxu0
    %451 = vmatprep.mubr.bf16.mxu0 0
    %452 = vmatmul.mubr.bf16.gmra.mrb[0].mxu0 %v373
    %v453 = vpop.f32.mrb[0].mxu0
    %v454 = vadd.f32 %v289, %v453
    %v455 = vpop.f32.mrb[0].mxu0
    %v456 = vpop.f32.mrb[0].mxu0
    %v457 = vadd.f32 %v292, %v456
    %v458 = vpop.f32.mrb[0].mxu0
    %459 = vmatprep.mubr.bf16.mxu0 0
    %460 = vmatmul.mubr.bf16.gmra.mrb[0].mxu0 %v376
    %v461 = vpop.f32.mrb[0].mxu0
    %v462 = vadd.f32 %v297, %v461
    %v463 = vpop.f32.mrb[0].mxu0
    %v464 = vpop.f32.mrb[0].mxu0
    %v465 = vadd.f32 %v300, %v464
    %v466 = vpop.f32.mrb[0].mxu0
    %467 = vmatprep.mubr.bf16.mxu0 0
    %468 = vmatmul.mubr.bf16.gmra.mrb[0].mxu0 %v379
    %v469 = vpop.f32.mrb[0].mxu0
    %v470 = vadd.f32 %v305, %v469
    %v471 = vpop.f32.mrb[0].mxu0
    %v472 = vpop.f32.mrb[0].mxu0
    %v473 = vadd.f32 %v308, %v472
    %v474 = vpop.f32.mrb[0].mxu0
    %475 = vmatprep.mubr.bf16.mxu0 0
    %476 = vmatmul.mubr.bf16.gmra.mrb[0].mxu0 %v382
    %v477 = vpop.f32.mrb[0].mxu0
    %v478 = vadd.f32 %v313, %v477
    %v479 = vpop.f32.mrb[0].mxu0
    %v480 = vpop.f32.mrb[0].mxu0
    %v481 = vadd.f32 %v316, %v480
    %v482 = vpop.f32.mrb[0].mxu0
    %483 = vdwg.mxu0
    %485 = vset.pattern.permute.xlu0 0
    %486 = vperm.xlu0 %485, %v138
    %v487 = vpop.permute.xlu0 %486
    %490 = vset.pattern.permute.xlu0 0
    %491 = vperm.xlu0 %490, %v139
    %v492 = vpop.permute.xlu0 %491
    %495 = vset.pattern.permute.xlu0 0
    %496 = vperm.xlu0 %495, %v140
    %v497 = vpop.permute.xlu0 %496
    %500 = vset.pattern.permute.xlu0 0
    %501 = vperm.xlu0 %500, %v141
    %v502 = vpop.permute.xlu0 %501
    %505 = vset.pattern.permute.xlu0 0
    %506 = vperm.xlu0 %505, %v142
    %v507 = vpop.permute.xlu0 %506
    %510 = vset.pattern.permute.xlu0 0
    %511 = vperm.xlu0 %510, %v143
    %v512 = vpop.permute.xlu0 %511
    %515 = vset.pattern.permute.xlu0 0
    %516 = vperm.xlu0 %515, %v144
    %v517 = vpop.permute.xlu0 %516
    %520 = vset.pattern.permute.xlu0 0
    %521 = vperm.xlu0 %520, %v145
    %v522 = vpop.permute.xlu0 %521
    %525 = vset.pattern.permute.xlu0 0
    %526 = vperm.xlu0 %525, %v146
    %v527 = vpop.permute.xlu0 %526
    %530 = vset.pattern.permute.xlu0 0
    %531 = vperm.xlu0 %530, %v147
    %v532 = vpop.permute.xlu0 %531
    %535 = vset.pattern.permute.xlu0 0
    %536 = vperm.xlu0 %535, %v148
    %v537 = vpop.permute.xlu0 %536
    %540 = vset.pattern.permute.xlu0 0
    %541 = vperm.xlu0 %540, %v149
    %v542 = vpop.permute.xlu0 %541
    %545 = vset.pattern.permute.xlu0 0
    %546 = vperm.xlu0 %545, %v150
    %v547 = vpop.permute.xlu0 %546
    %550 = vset.pattern.permute.xlu0 0
    %551 = vperm.xlu0 %550, %v151
    %v552 = vpop.permute.xlu0 %551
    %555 = vset.pattern.permute.xlu0 0
    %556 = vperm.xlu0 %555, %v152
    %v557 = vpop.permute.xlu0 %556
    %560 = vset.pattern.permute.xlu0 0
    %561 = vperm.xlu0 %560, %v153
    %v562 = vpop.permute.xlu0 %561
    %v564 = vadd.f32 %v422, %v487
    %v565 = vadd.f32 %v425, %v492
    %v566 = vadd.f32 %v430, %v497
    %v567 = vadd.f32 %v433, %v502
    %v568 = vadd.f32 %v438, %v507
    %v569 = vadd.f32 %v441, %v512
    %v570 = vadd.f32 %v446, %v517
    %v571 = vadd.f32 %v449, %v522
    %v572 = vadd.f32 %v454, %v527
    %v573 = vadd.f32 %v457, %v532
    %v574 = vadd.f32 %v462, %v537
    %v575 = vadd.f32 %v465, %v542
    %v576 = vadd.f32 %v470, %v547
    %v577 = vadd.f32 %v473, %v552
    %v578 = vadd.f32 %v478, %v557
    %v579 = vadd.f32 %v481, %v562
    %v580 = vmax.f32 %v564, 0.0
    %v581 = vmax.f32 %v565, 0.0
    %v582 = vmax.f32 %v566, 0.0
    %v583 = vmax.f32 %v567, 0.0
    %v584 = vmax.f32 %v568, 0.0
    %v585 = vmax.f32 %v569, 0.0
    %v586 = vmax.f32 %v570, 0.0
    %v587 = vmax.f32 %v571, 0.0
    %v588 = vmax.f32 %v572, 0.0
    %v589 = vmax.f32 %v573, 0.0
    %v590 = vmax.f32 %v574, 0.0
    %v591 = vmax.f32 %v575, 0.0
    %v592 = vmax.f32 %v576, 0.0
    %v593 = vmax.f32 %v577, 0.0
    %v594 = vmax.f32 %v578, 0.0
    %v595 = vmax.f32 %v579, 0.0
    %v596 = vpack.c.bf16 %v581, %v580
    %v597 = vpack.c.bf16 %v583, %v582
    %v598 = vpack.c.bf16 %v585, %v584
    %v599 = vpack.c.bf16 %v587, %v586
    %v600 = vpack.c.bf16 %v589, %v588
    %v601 = vpack.c.bf16 %v591, %v590
    %v602 = vpack.c.bf16 %v593, %v592
    %v603 = vpack.c.bf16 %v595, %v594
    %604 = vset.pattern.permute.xlu0 1
    %605 = vperm.xlu0 %604, %v138
    %v606 = vpop.permute.xlu0 %605
    %608 = vset.pattern.permute.xlu0 1
    %609 = vperm.xlu0 %608, %v139
    %v610 = vpop.permute.xlu0 %609
    %612 = vset.pattern.permute.xlu0 1
    %613 = vperm.xlu0 %612, %v140
    %v614 = vpop.permute.xlu0 %613
    %616 = vset.pattern.permute.xlu0 1
    %617 = vperm.xlu0 %616, %v141
    %v618 = vpop.permute.xlu0 %617
    %620 = vset.pattern.permute.xlu0 1
    %621 = vperm.xlu0 %620, %v142
    %v622 = vpop.permute.xlu0 %621
    %624 = vset.pattern.permute.xlu0 1
    %625 = vperm.xlu0 %624, %v143
    %v626 = vpop.permute.xlu0 %625
    %628 = vset.pattern.permute.xlu0 1
    %629 = vperm.xlu0 %628, %v144
    %v630 = vpop.permute.xlu0 %629
    %632 = vset.pattern.permute.xlu0 1
    %633 = vperm.xlu0 %632, %v145
    %v634 = vpop.permute.xlu0 %633
    %636 = vset.pattern.permute.xlu0 1
    %637 = vperm.xlu0 %636, %v146
    %v638 = vpop.permute.xlu0 %637
    %640 = vset.pattern.permute.xlu0 1
    %641 = vperm.xlu0 %640, %v147
    %v642 = vpop.permute.xlu0 %641
    %644 = vset.pattern.permute.xlu0 1
    %645 = vperm.xlu0 %644, %v148
    %v646 = vpop.permute.xlu0 %645
    %648 = vset.pattern.permute.xlu0 1
    %649 = vperm.xlu0 %648, %v149
    %v650 = vpop.permute.xlu0 %649
    %652 = vset.pattern.permute.xlu0 1
    %653 = vperm.xlu0 %652, %v150
    %v654 = vpop.permute.xlu0 %653
    %656 = vset.pattern.permute.xlu0 1
    %657 = vperm.xlu0 %656, %v151
    %v658 = vpop.permute.xlu0 %657
    %660 = vset.pattern.permute.xlu0 1
    %661 = vperm.xlu0 %660, %v152
    %v662 = vpop.permute.xlu0 %661
    %664 = vset.pattern.permute.xlu0 1
    %665 = vperm.xlu0 %664, %v153
    %v666 = vpop.permute.xlu0 %665
    %v684 = vunpack.c.l.b16 %v106
    %v685 = vunpack.c.l.b16 %v107
    %v686 = vunpack.c.l.b16 %v108
    %v687 = vunpack.c.l.b16 %v109
    %v688 = vunpack.c.l.b16 %v110
    %v689 = vunpack.c.l.b16 %v111
    %v690 = vunpack.c.l.b16 %v112
    %v691 = vunpack.c.l.b16 %v113
    %v692 = vunpack.c.l.b16 %v114
    %v693 = vunpack.c.l.b16 %v115
    %v694 = vunpack.c.l.b16 %v116
    %v695 = vunpack.c.l.b16 %v117
    %v696 = vunpack.c.l.b16 %v118
    %v697 = vunpack.c.l.b16 %v119
    %v698 = vunpack.c.l.b16 %v120
    %v699 = vunpack.c.l.b16 %v121
    %v700 = vpack.c.b16 %v685, %v684
    %v701 = vpack.c.b16 %v687, %v686
    %v702 = vpack.c.b16 %v689, %v688
    %v703 = vpack.c.b16 %v691, %v690
    %v704 = vpack.c.b16 %v693, %v692
    %v705 = vpack.c.b16 %v695, %v694
    %v706 = vpack.c.b16 %v697, %v696
    %v707 = vpack.c.b16 %v699, %v698
    %716 = vmatprep.subr.bf16.mxu0 0
    %717 = vmatpush1.bf16.msra.mxu0 %v596
    %718 = vmatprep.subr.bf16.mxu0 0
    %719 = vmatpush1.bf16.msra.mxu0 %v597
    %720 = vmatprep.subr.bf16.mxu0 0
    %721 = vmatpush1.bf16.msra.mxu0 %v598
    %722 = vmatprep.subr.bf16.mxu0 0
    %723 = vmatpush1.bf16.msra.mxu0 %v599
    %724 = vmatprep.subr.bf16.mxu0 0
    %725 = vmatpush1.bf16.msra.mxu0 %v600
    %726 = vmatprep.subr.bf16.mxu0 0
    %727 = vmatpush1.bf16.msra.mxu0 %v601
    %728 = vmatprep.subr.bf16.mxu0 0
    %729 = vmatpush1.bf16.msra.mxu0 %v602
    %730 = vmatprep.subr.bf16.mxu0 0
    %731 = vmatpush1.bf16.msra.mxu0 %v603
    %732 = vmatprep.subr.bf16.mxu0 0
    %733 = vmatpush1.bf16.msra.mxu0 0
    %734 = vmatprep.subr.bf16.mxu0 0
    %735 = vmatpush1.bf16.msra.mxu0 0
    %736 = vmatprep.subr.bf16.mxu0 0
    %737 = vmatpush1.bf16.msra.mxu0 0
    %738 = vmatprep.subr.bf16.mxu0 0
    %739 = vmatpush1.bf16.msra.mxu0 0
    %740 = vmatprep.subr.bf16.mxu0 0
    %741 = vmatpush1.bf16.msra.mxu0 0
    %742 = vmatprep.subr.bf16.mxu0 0
    %743 = vmatpush1.bf16.msra.mxu0 0
    %744 = vmatprep.subr.bf16.mxu0 0
    %745 = vmatpush1.bf16.msra.mxu0 0
    %746 = vmatprep.subr.bf16.mxu0 0
    %747 = vmatpush1.bf16.msra.mxu0 0
    %748 = vmatprep.mubr.bf16.mxu0 0
    %749 = vmatmul.mubr.bf16.gmra.mrb[0].mxu0 %v700
    %v750 = vpop.f32.mrb[0].mxu0
    %v751 = vadd.f32 %v606, %v750
    %v752 = vpop.f32.mrb[0].mxu0
    %v753 = vpop.f32.mrb[0].mxu0
    %v754 = vadd.f32 %v610, %v753
    %v755 = vpop.f32.mrb[0].mxu0
    %756 = vmatprep.mubr.bf16.mxu0 0
    %757 = vmatmul.mubr.bf16.gmra.mrb[0].mxu0 %v701
    %v758 = vpop.f32.mrb[0].mxu0
    %v759 = vadd.f32 %v614, %v758
    %v760 = vpop.f32.mrb[0].mxu0
    %v761 = vpop.f32.mrb[0].mxu0
    %v762 = vadd.f32 %v618, %v761
    %v763 = vpop.f32.mrb[0].mxu0
    %764 = vmatprep.mubr.bf16.mxu0 0
    %765 = vmatmul.mubr.bf16.gmra.mrb[0].mxu0 %v702
    %v766 = vpop.f32.mrb[0].mxu0
    %v767 = vadd.f32 %v622, %v766
    %v768 = vpop.f32.mrb[0].mxu0
    %v769 = vpop.f32.mrb[0].mxu0
    %v770 = vadd.f32 %v626, %v769
    %v771 = vpop.f32.mrb[0].mxu0
    %772 = vmatprep.mubr.bf16.mxu0 0
    %773 = vmatmul.mubr.bf16.gmra.mrb[0].mxu0 %v703
    %v774 = vpop.f32.mrb[0].mxu0
    %v775 = vadd.f32 %v630, %v774
    %v776 = vpop.f32.mrb[0].mxu0
    %v777 = vpop.f32.mrb[0].mxu0
    %v778 = vadd.f32 %v634, %v777
    %v779 = vpop.f32.mrb[0].mxu0
    %780 = vmatprep.mubr.bf16.mxu0 0
    %781 = vmatmul.mubr.bf16.gmra.mrb[0].mxu0 %v704
    %v782 = vpop.f32.mrb[0].mxu0
    %v783 = vadd.f32 %v638, %v782
    %v784 = vpop.f32.mrb[0].mxu0
    %v785 = vpop.f32.mrb[0].mxu0
    %v786 = vadd.f32 %v642, %v785
    %v787 = vpop.f32.mrb[0].mxu0
    %788 = vmatprep.mubr.bf16.mxu0 0
    %789 = vmatmul.mubr.bf16.gmra.mrb[0].mxu0 %v705
    %v790 = vpop.f32.mrb[0].mxu0
    %v791 = vadd.f32 %v646, %v790
    %v792 = vpop.f32.mrb[0].mxu0
    %v793 = vpop.f32.mrb[0].mxu0
    %v794 = vadd.f32 %v650, %v793
    %v795 = vpop.f32.mrb[0].mxu0
    %796 = vmatprep.mubr.bf16.mxu0 0
    %797 = vmatmul.mubr.bf16.gmra.mrb[0].mxu0 %v706
    %v798 = vpop.f32.mrb[0].mxu0
    %v799 = vadd.f32 %v654, %v798
    %v800 = vpop.f32.mrb[0].mxu0
    %v801 = vpop.f32.mrb[0].mxu0
    %v802 = vadd.f32 %v658, %v801
    %v803 = vpop.f32.mrb[0].mxu0
    %804 = vmatprep.mubr.bf16.mxu0 0
    %805 = vmatmul.mubr.bf16.gmra.mrb[0].mxu0 %v707
    %v806 = vpop.f32.mrb[0].mxu0
    %v807 = vadd.f32 %v662, %v806
    %v808 = vpop.f32.mrb[0].mxu0
    %v809 = vpop.f32.mrb[0].mxu0
    %v810 = vadd.f32 %v666, %v809
    %v811 = vpop.f32.mrb[0].mxu0
    %812 = vdwg.mxu0
    %v813 = vmax.f32 %v751, 0.0
    %v814 = vmax.f32 %v754, 0.0
    %v815 = vmax.f32 %v759, 0.0
    %v816 = vmax.f32 %v762, 0.0
    %v817 = vmax.f32 %v767, 0.0
    %v818 = vmax.f32 %v770, 0.0
    %v819 = vmax.f32 %v775, 0.0
    %v820 = vmax.f32 %v778, 0.0
    %v821 = vmax.f32 %v783, 0.0
    %v822 = vmax.f32 %v786, 0.0
    %v823 = vmax.f32 %v791, 0.0
    %v824 = vmax.f32 %v794, 0.0
    %v825 = vmax.f32 %v799, 0.0
    %v826 = vmax.f32 %v802, 0.0
    %v827 = vmax.f32 %v807, 0.0
    %v828 = vmax.f32 %v810, 0.0
    %v829 = vpack.c.bf16 %v814, %v813
    %v830 = vpack.c.bf16 %v816, %v815
    %v831 = vpack.c.bf16 %v818, %v817
    %v832 = vpack.c.bf16 %v820, %v819
    %v833 = vpack.c.bf16 %v822, %v821
    %v834 = vpack.c.bf16 %v824, %v823
    %v835 = vpack.c.bf16 %v826, %v825
    %v836 = vpack.c.bf16 %v828, %v827
    %837 = vset.pattern.permute.xlu0 2
    %838 = vperm.xlu0 %837, %v138
    %v839 = vpop.permute.xlu0 %838
    %841 = vset.pattern.permute.xlu0 2
    %842 = vperm.xlu0 %841, %v139
    %v843 = vpop.permute.xlu0 %842
    %844 = vset.pattern.permute.xlu0 2
    %845 = vperm.xlu0 %844, %v140
    %v846 = vpop.permute.xlu0 %845
    %847 = vset.pattern.permute.xlu0 2
    %848 = vperm.xlu0 %847, %v141
    %v849 = vpop.permute.xlu0 %848
    %850 = vset.pattern.permute.xlu0 2
    %851 = vperm.xlu0 %850, %v142
    %v852 = vpop.permute.xlu0 %851
    %853 = vset.pattern.permute.xlu0 2
    %854 = vperm.xlu0 %853, %v143
    %v855 = vpop.permute.xlu0 %854
    %856 = vset.pattern.permute.xlu0 2
    %857 = vperm.xlu0 %856, %v144
    %v858 = vpop.permute.xlu0 %857
    %859 = vset.pattern.permute.xlu0 2
    %860 = vperm.xlu0 %859, %v145
    %v861 = vpop.permute.xlu0 %860
    %862 = vset.pattern.permute.xlu0 2
    %863 = vperm.xlu0 %862, %v146
    %v864 = vpop.permute.xlu0 %863
    %865 = vset.pattern.permute.xlu0 2
    %866 = vperm.xlu0 %865, %v147
    %v867 = vpop.permute.xlu0 %866
    %868 = vset.pattern.permute.xlu0 2
    %869 = vperm.xlu0 %868, %v148
    %v870 = vpop.permute.xlu0 %869
    %871 = vset.pattern.permute.xlu0 2
    %872 = vperm.xlu0 %871, %v149
    %v873 = vpop.permute.xlu0 %872
    %874 = vset.pattern.permute.xlu0 2
    %875 = vperm.xlu0 %874, %v150
    %v876 = vpop.permute.xlu0 %875
    %877 = vset.pattern.permute.xlu0 2
    %878 = vperm.xlu0 %877, %v151
    %v879 = vpop.permute.xlu0 %878
    %880 = vset.pattern.permute.xlu0 2
    %881 = vperm.xlu0 %880, %v152
    %v882 = vpop.permute.xlu0 %881
    %883 = vset.pattern.permute.xlu0 2
    %884 = vperm.xlu0 %883, %v153
    %v885 = vpop.permute.xlu0 %884
    %v902 = vunpack.c.l.b16 %v122
    %v903 = vunpack.c.l.b16 %v123
    %v904 = vunpack.c.l.b16 %v124
    %v905 = vunpack.c.l.b16 %v125
    %v906 = vunpack.c.l.b16 %v126
    %v907 = vunpack.c.l.b16 %v127
    %v908 = vunpack.c.l.b16 %v128
    %v909 = vunpack.c.l.b16 %v129
    %v910 = vunpack.c.l.b16 %v130
    %v911 = vunpack.c.l.b16 %v131
    %v912 = vunpack.c.l.b16 %v132
    %v913 = vunpack.c.l.b16 %v133
    %v914 = vunpack.c.l.b16 %v134
    %v915 = vunpack.c.l.b16 %v135
    %v916 = vunpack.c.l.b16 %v136
    %v917 = vunpack.c.l.b16 %v137
    %v918 = vpack.c.b16 %v903, %v902
    %v919 = vpack.c.b16 %v905, %v904
    %v920 = vpack.c.b16 %v907, %v906
    %v921 = vpack.c.b16 %v909, %v908
    %v922 = vpack.c.b16 %v911, %v910
    %v923 = vpack.c.b16 %v913, %v912
    %v924 = vpack.c.b16 %v915, %v914
    %v925 = vpack.c.b16 %v917, %v916
    %934 = vmatprep.subr.bf16.mxu0 0
    %935 = vmatpush1.bf16.msra.mxu0 %v829
    %936 = vmatprep.subr.bf16.mxu0 0
    %937 = vmatpush1.bf16.msra.mxu0 %v830
    %938 = vmatprep.subr.bf16.mxu0 0
    %939 = vmatpush1.bf16.msra.mxu0 %v831
    %940 = vmatprep.subr.bf16.mxu0 0
    %941 = vmatpush1.bf16.msra.mxu0 %v832
    %942 = vmatprep.subr.bf16.mxu0 0
    %943 = vmatpush1.bf16.msra.mxu0 %v833
    %944 = vmatprep.subr.bf16.mxu0 0
    %945 = vmatpush1.bf16.msra.mxu0 %v834
    %946 = vmatprep.subr.bf16.mxu0 0
    %947 = vmatpush1.bf16.msra.mxu0 %v835
    %948 = vmatprep.subr.bf16.mxu0 0
    %949 = vmatpush1.bf16.msra.mxu0 %v836
    %950 = vmatprep.subr.bf16.mxu0 0
    %951 = vmatpush1.bf16.msra.mxu0 0
    %952 = vmatprep.subr.bf16.mxu0 0
    %953 = vmatpush1.bf16.msra.mxu0 0
    %954 = vmatprep.subr.bf16.mxu0 0
    %955 = vmatpush1.bf16.msra.mxu0 0
    %956 = vmatprep.subr.bf16.mxu0 0
    %957 = vmatpush1.bf16.msra.mxu0 0
    %958 = vmatprep.subr.bf16.mxu0 0
    %959 = vmatpush1.bf16.msra.mxu0 0
    %960 = vmatprep.subr.bf16.mxu0 0
    %961 = vmatpush1.bf16.msra.mxu0 0
    %962 = vmatprep.subr.bf16.mxu0 0
    %963 = vmatpush1.bf16.msra.mxu0 0
    %964 = vmatprep.subr.bf16.mxu0 0
    %965 = vmatpush1.bf16.msra.mxu0 0
    %966 = vmatprep.mubr.bf16.mxu0 0
    %967 = vmatmul.mubr.bf16.gmra.mrb[0].mxu0 %v918
    %v968 = vpop.f32.mrb[0].mxu0
    %v969 = vadd.f32 %v839, %v968
    %v970 = vpop.f32.mrb[0].mxu0
    %v971 = vpop.f32.mrb[0].mxu0
    %v972 = vpop.f32.mrb[0].mxu0
    %973 = vmatprep.mubr.bf16.mxu0 0
    %974 = vmatmul.mubr.bf16.gmra.mrb[0].mxu0 %v919
    %v975 = vpop.f32.mrb[0].mxu0
    %v976 = vpop.f32.mrb[0].mxu0
    %v977 = vpop.f32.mrb[0].mxu0
    %v978 = vpop.f32.mrb[0].mxu0
    %979 = vmatprep.mubr.bf16.mxu0 0
    %980 = vmatmul.mubr.bf16.gmra.mrb[0].mxu0 %v920
    %v981 = vpop.f32.mrb[0].mxu0
    %v982 = vpop.f32.mrb[0].mxu0
    %v983 = vpop.f32.mrb[0].mxu0
    %v984 = vpop.f32.mrb[0].mxu0
    %985 = vmatprep.mubr.bf16.mxu0 0
    %986 = vmatmul.mubr.bf16.gmra.mrb[0].mxu0 %v921
    %v987 = vpop.f32.mrb[0].mxu0
    %v988 = vpop.f32.mrb[0].mxu0
    %v989 = vpop.f32.mrb[0].mxu0
    %v990 = vpop.f32.mrb[0].mxu0
    %991 = vmatprep.mubr.bf16.mxu0 0
    %992 = vmatmul.mubr.bf16.gmra.mrb[0].mxu0 %v922
    %v993 = vpop.f32.mrb[0].mxu0
    %v994 = vpop.f32.mrb[0].mxu0
    %v995 = vpop.f32.mrb[0].mxu0
    %v996 = vpop.f32.mrb[0].mxu0
    %997 = vmatprep.mubr.bf16.mxu0 0
    %998 = vmatmul.mubr.bf16.gmra.mrb[0].mxu0 %v923
    %v999 = vpop.f32.mrb[0].mxu0
    %v1000 = vpop.f32.mrb[0].mxu0
    %v1001 = vpop.f32.mrb[0].mxu0
    %v1002 = vpop.f32.mrb[0].mxu0
    %1003 = vmatprep.mubr.bf16.mxu0 0
    %1004 = vmatmul.mubr.bf16.gmra.mrb[0].mxu0 %v924
    %v1005 = vpop.f32.mrb[0].mxu0
    %v1006 = vpop.f32.mrb[0].mxu0
    %v1007 = vpop.f32.mrb[0].mxu0
    %v1008 = vpop.f32.mrb[0].mxu0
    %1009 = vmatprep.mubr.bf16.mxu0 0
    %1010 = vmatmul.mubr.bf16.gmra.mrb[0].mxu0 %v925
    %v1011 = vpop.f32.mrb[0].mxu0
    %v1012 = vpop.f32.mrb[0].mxu0
    %v1013 = vpop.f32.mrb[0].mxu0
    %v1014 = vpop.f32.mrb[0].mxu0
    %1015 = vdwg.mxu0
    %v1017 = vrot.slane %v969, 1
    %v1019 = vmin.f32 %v969, %v1017
    %vm1020 = vcmask 57344
    %1021 = vst.msk [vmem:[#allocation10] sm:$0x1] %vm1020, %v1019
    // Predicated region
    $region34: #{gmpg_critic_forward.1} parent=1 // pred_check
      _
    $region35: #{gmpg_critic_forward.1} parent=1 // pred_check_branch
      %1023 = sbr.rel (0) target = $region37
    $region36: #{gmpg_critic_forward.1} parent=1 // pred_region
      %s1025 = ssub.s32 16, 16
      %1026 = vsyncadd [#allocation4], %s1025
      %s1028 = sshll.u32 [#allocation10], 4
      %s1029 = int_to_ptr.vmem [resolvable:$true] %s1028
      %1031 = dma.vmem_to_hbm [thread:$0]  %s1029, 16, %s4, [#allocation4]
    $region37: #{gmpg_critic_forward.1} parent=1 // pred_fallthru
      _
    // Predicated region
    $region38: #{gmpg_critic_forward.1} parent=1 // pred_check
      _
    $region39: #{gmpg_critic_forward.1} parent=1 // pred_check_branch
      %1033 = sbr.rel (0) target = $region41
    $region40: #{gmpg_critic_forward.1} parent=1 // pred_region
      %1034 = dma.done [#allocation4], 16
    $region41: #{gmpg_critic_forward.1} parent=1 // pred_fallthru
      _
    %1035 = vsyncpa [#allocation3], 1
    %1036 = vsyncpa [#allocation6], 1
    %1037 = vsyncpa [#allocation9], 1
    %1038 = vsyncpa [#allocation4], 1

</llo_original>
